<compile_context>
chip_gen: v7x
topology: tpu7x:2x2x1
jax: 0.10.0
libtpu: 0.0.40
codegen_flags: <defaults>
</compile_context>

<pallas_src>
import jax
import jax.numpy as jnp
from jax.experimental import pallas as pl
from jax.experimental.pallas import tpu as pltpu

_LANES = 128
# 2048 * 128 * 4 B = 1 MiB per f32 block buffer -> with double buffering on
# input + output this stays well under even v5e's 16 MiB scoped-VMEM default
# and v7x's 32 MiB default (64 MiB physical).
_TILE_ROWS = 2048


def _sigmoid_kernel(x_ref, o_ref):
    # Upcast to f32 (no-op for f32 inputs; mandatory on v5e which lacks bf16
    # VPU/EUP). exp() and the approximate reciprocal both run in the EUP slot.
    x = x_ref[...].astype(jnp.float32)
    o_ref[...] = pl.reciprocal(1.0 + jnp.exp(-x), approx=True).astype(o_ref.dtype)


def work_forward(x: jax.Array) -> jax.Array:
    """Applies elementwise sigmoid, preserving shape/dtype (NCHW input)."""
    orig_shape = x.shape
    orig_dtype = x.dtype

    flat = x.reshape(-1)
    n = flat.shape[0]

    # Rare ragged tail: pad up to a lane multiple only when needed.
    rem = n % _LANES
    if rem != 0:
        flat = jnp.pad(flat, (0, _LANES - rem))
    rows = flat.shape[0] // _LANES
    x2d = flat.reshape(rows, _LANES)

    # Tile rows; when the array is smaller than one tile, use the full extent
    # (block dim equal to the full array dim satisfies the (8,128) rule).
    block_rows = min(_TILE_ROWS, rows)
    grid = (pl.cdiv(rows, block_rows),)

    itemsize = jnp.dtype(orig_dtype).itemsize
    out2d = pl.pallas_call(
        _sigmoid_kernel,
        out_shape=jax.ShapeDtypeStruct((rows, _LANES), orig_dtype),
        grid_spec=pl.GridSpec(
            grid=grid,
            in_specs=[pl.BlockSpec((block_rows, _LANES), lambda i: (i, 0))],
            out_specs=pl.BlockSpec((block_rows, _LANES), lambda i: (i, 0)),
        ),
        compiler_params=pltpu.CompilerParams(
            # Elementwise + independent blocks -> let v7x split across its 2 TCs.
            dimension_semantics=("parallel",),
        ),
        cost_estimate=pl.CostEstimate(
            flops=4 * n,
            transcendentals=n,
            bytes_accessed=2 * n * itemsize,
        ),
    )(x2d)

    out_flat = out2d.reshape(-1)
    if rem != 0:
        out_flat = out_flat[:n]
    return out_flat.reshape(orig_shape)


if __name__ == "__main__":
    key = jax.random.PRNGKey(0)
    # The module reshapes its data to (-1, 1, 2, 2); use a small NCHW input
    # whose element count (32*1*2*2 = 128) is lane-aligned, so the fast
    # no-pad / no-slice path is exercised.
    x = jax.random.normal(key, (32, 1, 2, 2), dtype=jnp.float32)

    out = work_forward(x)
    out = jax.block_until_ready(out)

    # Correctness check against plain-JAX reference (tolerance loosened for
    # the EUP approximate reciprocal).
    ref = jax.nn.sigmoid(x)
    assert out.shape == x.shape and out.dtype == x.dtype
    assert jnp.allclose(out, ref, atol=2e-3, rtol=2e-3), "mismatch vs reference sigmoid"

    print("KERNEL_OK")
</pallas_src>

<mosaic_0001>
module attributes {stable_mosaic.version = 11 : i64} {
  func.func @_sigmoid_kernel(%arg0: i32, %arg1: memref<1x128xf32, #tpu.memory_space<vmem>>, %arg2: memref<1x128xf32, #tpu.memory_space<vmem>>) attributes {dimension_semantics = [#tpu.dimension_semantics<parallel>], iteration_bounds = array<i64: 1>, scalar_prefetch = 0 : i64, scratch_operands = 0 : i64, tpu.core_type = #tpu.core_type<tc>, window_params = [{transform_indices = @transform_0, window_bounds = array<i64: 1, 128>}, {transform_indices = @transform_1, window_bounds = array<i64: 1, 128>}]} {
    %c0 = arith.constant 0 : index
    %c0_0 = arith.constant 0 : index
    %0 = vector.load %arg1[%c0, %c0_0] : memref<1x128xf32, #tpu.memory_space<vmem>>, vector<1x128xf32>
    %cst = arith.constant 0.000000e+00 : f32
    %1 = vector.broadcast %cst : f32 to vector<1x128xf32>
    %2 = arith.subf %1, %0 : vector<1x128xf32>
    %3 = math.exp %2 : vector<1x128xf32>
    %cst_1 = arith.constant 1.000000e+00 : f32
    %4 = vector.broadcast %cst_1 : f32 to vector<1x128xf32>
    %5 = arith.addf %4, %3 : vector<1x128xf32>
    %6 = tpu.reciprocal %5 {approx = true} : vector<1x128xf32> -> vector<1x128xf32>
    %c0_2 = arith.constant 0 : index
    %c0_3 = arith.constant 0 : index
    %7 = vector.load %arg2[%c0_2, %c0_3] : memref<1x128xf32, #tpu.memory_space<vmem>>, vector<1x128xf32>
    tpu.vector_store %arg2[%c0_2, %c0_3], %6 {strides = array<i32>} : memref<1x128xf32, #tpu.memory_space<vmem>>, vector<1x128xf32>,
    return
  }
  func.func @transform_0(%arg0: i32) -> (i32, i32) {
    %c0_i32 = arith.constant 0 : i32
    %c0_i32_0 = arith.constant 0 : i32
    return %arg0, %c0_i32 : i32, i32
  }
  func.func @transform_1(%arg0: i32) -> (i32, i32) {
    %c0_i32 = arith.constant 0 : i32
    %c0_i32_0 = arith.constant 0 : i32
    return %arg0, %c0_i32 : i32, i32
  }
}

</mosaic_0001>

<llo_original>
// kernel: tpu_custom_call.1
$region0: #{tpu_custom_call.1}
  #allocation0 [shape = 'u32[]', space=smem, size = 0x4, offset = 0x4, fixed_abs, tag = 'smem constant byte address 0x4 - core index']
  #allocation1 [shape = 'u32[144,128]{1,0:T(1,128)}', space=vmem, size = 0x12000, scoped, tag = 'internal scratch']
  %s0 = inlined_call_operand.hbm [shape: f32[1,128], index: 0, kind: input, shape index: {}]
  %s1 = inlined_call_operand.hbm [shape: f32[1,128], index: 1, kind: output, shape index: {}]
  %s2 = sld [smem:[#allocation0]]
  $region18: #{tpu_custom_call.1} parent=0
    _
  %s4 = ssub.s32 1, %s2
  %s5 = scalar_select 0, %s4, %s2
  $region1: #{tpu_custom_call.1} parent=0
    #allocation2 [shape = 'u8[512]{0}', space=vmem, size = 0x400, scoped, tag = 'input window, operand 0, single buffered']
    #allocation3 [shape = 's32[1]{0}', space=sflag, size = 0x4, scoped, tag = 'scoped memory for tpu_custom_call.1']
    #allocation4 [shape = 's32[1]{0}', space=sflag, size = 0x4, scoped, tag = 'scoped memory for tpu_custom_call.1']
    #allocation5 [shape = 'u8[512]{0}', space=vmem, size = 0x400, scoped, tag = 'output window, operand 0, single buffered']
    %6 = vsyncpa [#allocation3], 0
    %7 = vsyncpa [#allocation4], 0
    // Predicated region
    $region2: #{tpu_custom_call.1} parent=1 // pred_check
      _
    $region3: #{tpu_custom_call.1} parent=1 // pred_check_branch
      %9 = sbr.rel (0) target = $region5
    $region4: #{tpu_custom_call.1} parent=1 // pred_region
      %s11 = ssub.s32 16, 16
      %12 = vsyncadd [#allocation3], %s11
      %s14 = sshll.u32 [#allocation2], 4
      %s15 = int_to_ptr.vmem [resolvable:$true] %s14
      %17 = dma.hbm_to_vmem [thread:$0]  %s0, 16, %s15, [#allocation3]
    $region5: #{tpu_custom_call.1} parent=1 // pred_fallthru
      _
    // Predicated region
    $region6: #{tpu_custom_call.1} parent=1 // pred_check
      _
    $region7: #{tpu_custom_call.1} parent=1 // pred_check_branch
      %19 = sbr.rel (0) target = $region9
    $region8: #{tpu_custom_call.1} parent=1 // pred_region
      %20 = dma.done [#allocation3], 16
    $region9: #{tpu_custom_call.1} parent=1 // pred_fallthru
      _
    %v21 = vld [vmem:[#allocation2] sm:$0x1]
    %v22 = vsub.f32 0.0, %v21
    %v23 = vmul.f32 %v22, 1.442695
    %v24 = vpow.pop %v23
    %v25 = vadd.f32 %v24, 1.0
    %v26 = vrcp.pop %v25
    %27 = vst [vmem:[#allocation5] sm:$0x1] %v26
    // Predicated region
    $region10: #{tpu_custom_call.1} parent=1 // pred_check
      _
    $region11: #{tpu_custom_call.1} parent=1 // pred_check_branch
      %29 = sbr.rel (0) target = $region13
    $region12: #{tpu_custom_call.1} parent=1 // pred_region
      %s31 = ssub.s32 16, 16
      %32 = vsyncadd [#allocation4], %s31
      %s34 = sshll.u32 [#allocation5], 4
      %s35 = int_to_ptr.vmem [resolvable:$true] %s34
      %37 = dma.vmem_to_hbm [thread:$0]  %s35, 16, %s1, [#allocation4]
    $region13: #{tpu_custom_call.1} parent=1 // pred_fallthru
      _
    // Predicated region
    $region14: #{tpu_custom_call.1} parent=1 // pred_check
      _
    $region15: #{tpu_custom_call.1} parent=1 // pred_check_branch
      %39 = sbr.rel (0) target = $region17
    $region16: #{tpu_custom_call.1} parent=1 // pred_region
      %40 = dma.done [#allocation4], 16
    $region17: #{tpu_custom_call.1} parent=1 // pred_fallthru
      _
    %41 = vsyncpa [#allocation3], 1
    %42 = vsyncpa [#allocation4], 1

</llo_original>
